<compile_context>
chip_gen: v5e
topology: v5e:2x2
jax: 0.10.0
libtpu: 0.0.40
codegen_flags: <defaults>
</compile_context>

<pallas_src>
import functools

import jax
import jax.numpy as jnp
from jax.experimental import pallas as pl
from jax.experimental.pallas import tpu as pltpu

_MIB = 1024 * 1024


def _round_up(x, m):
    return ((x + m - 1) // m) * m


def _tpu_generation():
    try:
        kind = jax.devices()[0].device_kind.lower()
    except Exception:
        return "default"
    if "v7" in kind:
        return "v7x"
    if "v6" in kind:
        return "v6e"
    if "v5" in kind:
        return "v5e"
    return "default"


# tile_m / tile_k targets, MXU-width alignment for tile_k, and VMEM cap.
_GEN_CFG = {
    "v5e":     dict(tile_m=512,  tile_k=512, k_align=128, vmem_cap=100 * _MIB),
    "v6e":     dict(tile_m=1024, tile_k=512, k_align=256, vmem_cap=100 * _MIB),
    "v7x":     dict(tile_m=512,  tile_k=256, k_align=256, vmem_cap=56 * _MIB),
    "default": dict(tile_m=512,  tile_k=256, k_align=128, vmem_cap=56 * _MIB),
}


def _pick_tile_k(d_ffn, target, align):
    """Multiple of `align`, <= max(target, align), <= d_ffn rounded up to align."""
    t = min(target, _round_up(d_ffn, align))
    t = max(align, (t // align) * align)
    return t


def ffn_kernel(x_ref, w1_ref, b1_ref, w2_ref, b2_ref, gamma_ref, beta_ref,
               o_ref, *scratch, eps: float):
    # For f32 outputs we accumulate directly into the revisited output block;
    # for low-precision outputs a f32 VMEM scratch accumulator is passed.
    acc_ref = scratch[0] if scratch else o_ref
    k = pl.program_id(1)

    @pl.when(k == 0)
    def _():
        acc_ref[...] = jnp.zeros_like(acc_ref)

    # linear1 chunk + ReLU (dropout1 = identity in eval). Native-dtype MXU
    # operands, f32 accumulation.
    h = jnp.dot(x_ref[...], w1_ref[...], preferred_element_type=jnp.float32)
    h = jnp.maximum(h + b1_ref[...].astype(jnp.float32), 0.0)          # (tm, tk)

    # linear2 partial sum for this d_ffn chunk (dropout2 = identity in eval).
    acc_ref[...] += jnp.dot(h.astype(w2_ref.dtype), w2_ref[...],
                            preferred_element_type=jnp.float32
                            ).astype(acc_ref.dtype)                    # (tm, d_model)

    # Epilogue once the reduction over d_ffn is complete.
    @pl.when(k == pl.num_programs(1) - 1)
    def _():
        x = x_ref[...].astype(jnp.float32)
        y = x + acc_ref[...].astype(jnp.float32) + b2_ref[...].astype(jnp.float32)
        mean = jnp.mean(y, axis=-1, keepdims=True)
        centered = y - mean
        var = jnp.mean(centered * centered, axis=-1, keepdims=True)
        normed = centered * jax.lax.rsqrt(var + eps)                   # EUP rsqrt
        out = (normed * gamma_ref[...].astype(jnp.float32)
               + beta_ref[...].astype(jnp.float32))
        o_ref[...] = out.astype(o_ref.dtype)


def ffn_forward(x, w1, b1, w2, b2, gamma, beta, *, eps=1e-5,
                tile_m=None, tile_k=None):
    """x: (batch, seq, d_model). w1: (d_model, d_ffn), w2: (d_ffn, d_model)."""
    batch, seq, d_model = x.shape
    d_ffn = w1.shape[1]
    rows = batch * seq

    gen = _tpu_generation()
    cfg = _GEN_CFG[gen]
    k_align = cfg["k_align"]
    vmem_cap = cfg["vmem_cap"]
    try:  # never exceed the physical per-core VMEM (leave ~1/8 headroom)
        vmem_cap = min(vmem_cap, int(pltpu.get_tpu_info().vmem_capacity_bytes * 7 // 8))
    except Exception:
        pass

    if tile_m is None:
        tile_m = cfg["tile_m"]
    if tile_k is None:
        tile_k = cfg["tile_k"]

    # v7x has 2 TensorCores: make sure the "parallel" row axis has >= 2 tiles
    # for medium/large row counts so both cores get work.
    if gen == "v7x":
        while tile_m >= 256 and rows > 128 and pl.cdiv(rows, tile_m) < 2:
            tile_m //= 2

    # Clamp row tile to the (16-aligned) problem size; 16 keeps both f32 (8-row)
    # and bf16 (16-row packed) sublane layouts happy.
    tile_m = min(tile_m, _round_up(rows, 16))
    tile_k = _pick_tile_k(d_ffn, tile_k, k_align)

    itemsize = jnp.dtype(x.dtype).itemsize
    use_scratch = x.dtype != jnp.float32     # f32 outputs accumulate in-place

    def _vmem_est(tm, tk):
        e = 2 * itemsize * (tm * d_model          # x tile (double-buffered)
                            + d_model * tk        # W1 chunk
                            + tk                  # b1 chunk
                            + tk * d_model        # W2 chunk
                            + 3 * d_model)        # b2, gamma, beta
        e += 2 * itemsize * tm * d_model          # out tile
        if use_scratch:
            e += 4 * tm * d_model                 # f32 accumulator scratch
        return e

    # Fit inside the VMEM cap: shrink tile_m first, then tile_k (floor ~256 to
    # keep per-step grid overhead amortized).
    while _vmem_est(tile_m, tile_k) > vmem_cap and tile_m > 128:
        tile_m = max(16, ((tile_m // 2) // 16) * 16)
    k_floor = max(k_align, min(256, tile_k))
    while _vmem_est(tile_m, tile_k) > vmem_cap and tile_k > k_floor:
        tile_k = max(k_floor, ((tile_k // 2) // k_align) * k_align)

    rows_p = _round_up(rows, tile_m)
    d_ffn_p = _round_up(d_ffn, tile_k)

    # Pad rows of x; pad d_ffn with zero W1 columns / b1 entries / W2 rows
    # (zero through ReLU contributes exactly zero to the second matmul).
    x2d = x.reshape(rows, d_model)
    if rows_p != rows:
        x2d = jnp.pad(x2d, ((0, rows_p - rows), (0, 0)))
    if d_ffn_p != d_ffn:
        pad = d_ffn_p - d_ffn
        w1 = jnp.pad(w1, ((0, 0), (0, pad)))
        b1 = jnp.pad(b1, ((0, pad),))
        w2 = jnp.pad(w2, ((0, pad), (0, 0)))

    # 1-D params as (1, N) so they live cleanly on the lane axis.
    b1_2d = b1.reshape(1, d_ffn_p)
    b2_2d = b2.reshape(1, d_model)
    gamma_2d = gamma.reshape(1, d_model)
    beta_2d = beta.reshape(1, d_model)

    n_row_tiles = rows_p // tile_m
    grid = (n_row_tiles, d_ffn_p // tile_k)

    est = _vmem_est(tile_m, tile_k)
    vmem_limit = int(min(vmem_cap, max(2 * est, 32 * _MIB)))

    # W1/W2 are re-streamed from HBM once per row tile.
    cost = pl.CostEstimate(
        flops=2 * 2 * rows_p * d_model * d_ffn_p,
        transcendentals=rows_p,
        bytes_accessed=itemsize * (rows_p * d_model * 2                    # x in, out
                                   + n_row_tiles * (d_model * d_ffn_p * 2  # W1, W2
                                                    + d_ffn_p + 3 * d_model)),
    )

    scratch_shapes = ([pltpu.VMEM((tile_m, d_model), jnp.float32)]
                      if use_scratch else [])

    out2d = pl.pallas_call(
        functools.partial(ffn_kernel, eps=eps),
        out_shape=jax.ShapeDtypeStruct((rows_p, d_model), x.dtype),
        grid_spec=pltpu.PrefetchScalarGridSpec(
            num_scalar_prefetch=0,
            grid=grid,
            in_specs=[
                pl.BlockSpec((tile_m, d_model), lambda i, k: (i, 0)),   # x tile
                pl.BlockSpec((d_model, tile_k), lambda i, k: (0, k)),   # W1 chunk
                pl.BlockSpec((1, tile_k), lambda i, k: (0, k)),         # b1 chunk
                pl.BlockSpec((tile_k, d_model), lambda i, k: (k, 0)),   # W2 chunk
                pl.BlockSpec((1, d_model), lambda i, k: (0, 0)),        # b2
                pl.BlockSpec((1, d_model), lambda i, k: (0, 0)),        # gamma
                pl.BlockSpec((1, d_model), lambda i, k: (0, 0)),        # beta
            ],
            out_specs=pl.BlockSpec((tile_m, d_model), lambda i, k: (i, 0)),
            scratch_shapes=scratch_shapes,
        ),
        compiler_params=pltpu.CompilerParams(
            dimension_semantics=("parallel", "arbitrary"),
            vmem_limit_bytes=vmem_limit),
        cost_estimate=cost,
    )(x2d, w1, b1_2d, w2, b2_2d, gamma_2d, beta_2d)

    return out2d[:rows].reshape(batch, seq, d_model)


def init_params(key, d_model, d_ffn, dtype=jnp.float32):
    """Deterministic synthetic params (shapes match nn.Linear/LayerNorm)."""
    k1, k2, k3, k4 = jax.random.split(key, 4)
    s1 = 1.0 / jnp.sqrt(d_model)
    s2 = 1.0 / jnp.sqrt(d_ffn)
    # Stored as (in, out) = PyTorch weight transposed, so kernel does x @ W.
    w1 = (jax.random.uniform(k1, (d_model, d_ffn), jnp.float32, -1.0, 1.0) * s1).astype(dtype)
    b1 = (jax.random.uniform(k2, (d_ffn,), jnp.float32, -1.0, 1.0) * s1).astype(dtype)
    w2 = (jax.random.uniform(k3, (d_ffn, d_model), jnp.float32, -1.0, 1.0) * s2).astype(dtype)
    b2 = (jax.random.uniform(k4, (d_model,), jnp.float32, -1.0, 1.0) * s2).astype(dtype)
    gamma = jnp.ones((d_model,), dtype)
    beta = jnp.zeros((d_model,), dtype)
    return w1, b1, w2, b2, gamma, beta


def ffn_reference(x, w1, b1, w2, b2, gamma, beta, eps=1e-5):
    """Pure-JAX reference of the PyTorch forward (eval mode)."""
    xf = x.astype(jnp.float32)
    h = jnp.maximum(xf @ w1.astype(jnp.float32) + b1.astype(jnp.float32), 0.0)
    t2 = h @ w2.astype(jnp.float32) + b2.astype(jnp.float32)
    y = xf + t2
    mean = jnp.mean(y, axis=-1, keepdims=True)
    var = jnp.mean((y - mean) ** 2, axis=-1, keepdims=True)
    out = (y - mean) / jnp.sqrt(var + eps) * gamma.astype(jnp.float32) \
        + beta.astype(jnp.float32)
    return out.astype(x.dtype)


if __name__ == "__main__":
    key = jax.random.PRNGKey(0)
    kx, kp, kx2, kp3, kx3 = jax.random.split(key, 5)

    d_model, d_ffn = 128, 256
    params = init_params(kp, d_model, d_ffn)

    # Case 1: small f32, tile-aligned rows (accumulate-into-output path).
    batch, seq = 2, 8
    x = jax.random.normal(kx, (batch, seq, d_model), jnp.float32)
    out = jax.block_until_ready(ffn_forward(x, *params))
    ref = ffn_reference(x, *params)
    assert out.shape == (batch, seq, d_model)
    assert jnp.allclose(out, ref, atol=5e-3, rtol=5e-3), "mismatch vs reference (case 1)"

    # Case 2: rows not a multiple of the tile -> row pad + slice path.
    batch2, seq2 = 2, 9
    x2 = jax.random.normal(kx2, (batch2, seq2, d_model), jnp.float32)
    out2 = jax.block_until_ready(ffn_forward(x2, *params))
    ref2 = ffn_reference(x2, *params)
    assert out2.shape == (batch2, seq2, d_model)
    assert jnp.allclose(out2, ref2, atol=5e-3, rtol=5e-3), "mismatch vs reference (case 2)"

    # Case 3: bf16 activations/weights + non-aligned d_ffn -> d_ffn zero-pad
    # path and f32 scratch accumulator path (looser tolerance: mixed precision).
    d_ffn3 = 320
    params3 = init_params(kp3, d_model, d_ffn3, dtype=jnp.bfloat16)
    x3 = jax.random.normal(kx3, (batch, seq, d_model), jnp.bfloat16)
    out3 = jax.block_until_ready(ffn_forward(x3, *params3))
    ref3 = ffn_reference(x3, *params3)
    assert out3.shape == (batch, seq, d_model)
    assert jnp.allclose(out3.astype(jnp.float32), ref3.astype(jnp.float32),
                        atol=8e-2, rtol=8e-2), "mismatch vs reference (case 3)"

    print("KERNEL_OK")
</pallas_src>

<mosaic_0001>
module attributes {stable_mosaic.version = 11 : i64} {
  func.func @ffn_kernel(%arg0: i32, %arg1: i32, %arg2: memref<16x128xf32, #tpu.memory_space<vmem>>, %arg3: memref<128x256xf32, #tpu.memory_space<vmem>>, %arg4: memref<1x256xf32, #tpu.memory_space<vmem>>, %arg5: memref<256x128xf32, #tpu.memory_space<vmem>>, %arg6: memref<1x128xf32, #tpu.memory_space<vmem>>, %arg7: memref<1x128xf32, #tpu.memory_space<vmem>>, %arg8: memref<1x128xf32, #tpu.memory_space<vmem>>, %arg9: memref<16x128xf32, #tpu.memory_space<vmem>>) attributes {dimension_semantics = [#tpu.dimension_semantics<parallel>, #tpu.dimension_semantics<arbitrary>], iteration_bounds = array<i64: 1, 1>, scalar_prefetch = 0 : i64, scratch_operands = 0 : i64, tpu.core_type = #tpu.core_type<tc>, window_params = [{transform_indices = @transform_0, window_bounds = array<i64: 16, 128>}, {transform_indices = @transform_1, window_bounds = array<i64: 128, 256>}, {transform_indices = @transform_2, window_bounds = array<i64: 1, 256>}, {transform_indices = @transform_3, window_bounds = array<i64: 256, 128>}, {pipeline_mode = #tpu.pipeline_mode<synchronous>, transform_indices = @transform_4, window_bounds = array<i64: 1, 128>}, {pipeline_mode = #tpu.pipeline_mode<synchronous>, transform_indices = @transform_5, window_bounds = array<i64: 1, 128>}, {pipeline_mode = #tpu.pipeline_mode<synchronous>, transform_indices = @transform_6, window_bounds = array<i64: 1, 128>}, {transform_indices = @transform_7, window_bounds = array<i64: 16, 128>}]} {
    %c0_i32 = arith.constant 0 : i32
    %0 = arith.cmpi eq, %arg1, %c0_i32 : i32
    %1 = arith.extui %0 : i1 to i32
    %c0_i32_0 = arith.constant 0 : i32
    %2 = arith.cmpi ne, %1, %c0_i32_0 : i32
    scf.if %2 {
      %cst_16 = arith.constant 0.000000e+00 : f32
      %19 = vector.broadcast %cst_16 : f32 to vector<16x128xf32>
      %c0_17 = arith.constant 0 : index
      %c0_18 = arith.constant 0 : index
      %20 = vector.load %arg9[%c0_17, %c0_18] : memref<16x128xf32, #tpu.memory_space<vmem>>, vector<16x128xf32>
      tpu.vector_store %arg9[%c0_17, %c0_18], %19 {strides = array<i32>} : memref<16x128xf32, #tpu.memory_space<vmem>>, vector<16x128xf32>,
    } else {
    }
    %c0 = arith.constant 0 : index
    %c0_1 = arith.constant 0 : index
    %3 = vector.load %arg2[%c0, %c0_1] : memref<16x128xf32, #tpu.memory_space<vmem>>, vector<16x128xf32>
    %c0_2 = arith.constant 0 : index
    %c0_3 = arith.constant 0 : index
    %4 = vector.load %arg3[%c0_2, %c0_3] : memref<128x256xf32, #tpu.memory_space<vmem>>, vector<128x256xf32>
    %cst = arith.constant dense<0.000000e+00> : vector<16x256xf32>
    %5 = tpu.matmul %3, %4, %cst {dimension_numbers = #tpu.dot_dimension_numbers<[1], [0], [0], [1], [0, 0, 1, 1], [], []>} : vector<16x128xf32>, vector<128x256xf32>, vector<16x256xf32> -> vector<16x256xf32>
    %c0_4 = arith.constant 0 : index
    %c0_5 = arith.constant 0 : index
    %6 = vector.load %arg4[%c0_4, %c0_5] : memref<1x256xf32, #tpu.memory_space<vmem>>, vector<1x256xf32>
    %7 = vector.broadcast %6 : vector<1x256xf32> to vector<16x256xf32>
    %8 = arith.addf %5, %7 : vector<16x256xf32>
    %cst_6 = arith.constant 0.000000e+00 : f32
    %9 = vector.broadcast %cst_6 : f32 to vector<16x256xf32>
    %10 = arith.maximumf %8, %9 : vector<16x256xf32>
    %c0_7 = arith.constant 0 : index
    %c0_8 = arith.constant 0 : index
    %11 = vector.load %arg9[%c0_7, %c0_8] : memref<16x128xf32, #tpu.memory_space<vmem>>, vector<16x128xf32>
    %c0_9 = arith.constant 0 : index
    %c0_10 = arith.constant 0 : index
    %12 = vector.load %arg5[%c0_9, %c0_10] : memref<256x128xf32, #tpu.memory_space<vmem>>, vector<256x128xf32>
    %cst_11 = arith.constant dense<0.000000e+00> : vector<16x128xf32>
    %13 = tpu.matmul %10, %12, %cst_11 {dimension_numbers = #tpu.dot_dimension_numbers<[1], [0], [0], [1], [0, 0, 1, 1], [], []>} : vector<16x256xf32>, vector<256x128xf32>, vector<16x128xf32> -> vector<16x128xf32>
    %14 = arith.addf %11, %13 : vector<16x128xf32>
    %c0_12 = arith.constant 0 : index
    %c0_13 = arith.constant 0 : index
    %15 = vector.load %arg9[%c0_12, %c0_13] : memref<16x128xf32, #tpu.memory_space<vmem>>, vector<16x128xf32>
    tpu.vector_store %arg9[%c0_12, %c0_13], %14 {strides = array<i32>} : memref<16x128xf32, #tpu.memory_space<vmem>>, vector<16x128xf32>,
    %c0_i32_14 = arith.constant 0 : i32
    %16 = arith.cmpi eq, %arg1, %c0_i32_14 : i32
    %17 = arith.extui %16 : i1 to i32
    %c0_i32_15 = arith.constant 0 : i32
    %18 = arith.cmpi ne, %17, %c0_i32_15 : i32
    scf.if %18 {
      %c0_16 = arith.constant 0 : index
      %c0_17 = arith.constant 0 : index
      %19 = vector.load %arg2[%c0_16, %c0_17] : memref<16x128xf32, #tpu.memory_space<vmem>>, vector<16x128xf32>
      %c0_18 = arith.constant 0 : index
      %c0_19 = arith.constant 0 : index
      %20 = vector.load %arg9[%c0_18, %c0_19] : memref<16x128xf32, #tpu.memory_space<vmem>>, vector<16x128xf32>
      %21 = arith.addf %19, %20 : vector<16x128xf32>
      %c0_20 = arith.constant 0 : index
      %c0_21 = arith.constant 0 : index
      %22 = vector.load %arg6[%c0_20, %c0_21] : memref<1x128xf32, #tpu.memory_space<vmem>>, vector<1x128xf32>
      %23 = vector.broadcast %22 : vector<1x128xf32> to vector<16x128xf32>
      %24 = arith.addf %21, %23 : vector<16x128xf32>
      %cst_22 = arith.constant dense<0.000000e+00> : vector<16xf32>
      %25 = vector.multi_reduction <add>, %24, %cst_22 [1] : vector<16x128xf32> to vector<16xf32>
      %26 = vector.shape_cast %25 : vector<16xf32> to vector<16x1xf32>
      %cst_23 = arith.constant 1.280000e+02 : f32
      %27 = vector.broadcast %cst_23 : f32 to vector<16x1xf32>
      %28 = arith.divf %26, %27 : vector<16x1xf32>
      %29 = vector.broadcast %28 : vector<16x1xf32> to vector<16x128xf32>
      %30 = arith.subf %24, %29 : vector<16x128xf32>
      %31 = arith.mulf %30, %30 : vector<16x128xf32>
      %cst_24 = arith.constant dense<0.000000e+00> : vector<16xf32>
      %32 = vector.multi_reduction <add>, %31, %cst_24 [1] : vector<16x128xf32> to vector<16xf32>
      %33 = vector.shape_cast %32 : vector<16xf32> to vector<16x1xf32>
      %cst_25 = arith.constant 1.280000e+02 : f32
      %34 = vector.broadcast %cst_25 : f32 to vector<16x1xf32>
      %35 = arith.divf %33, %34 : vector<16x1xf32>
      %cst_26 = arith.constant 9.99999974E-6 : f32
      %36 = vector.broadcast %cst_26 : f32 to vector<16x1xf32>
      %37 = arith.addf %35, %36 : vector<16x1xf32>
      %38 = math.rsqrt %37 : vector<16x1xf32>
      %39 = vector.broadcast %38 : vector<16x1xf32> to vector<16x128xf32>
      %40 = arith.mulf %30, %39 : vector<16x128xf32>
      %c0_27 = arith.constant 0 : index
      %c0_28 = arith.constant 0 : index
      %41 = vector.load %arg7[%c0_27, %c0_28] : memref<1x128xf32, #tpu.memory_space<vmem>>, vector<1x128xf32>
      %42 = vector.broadcast %41 : vector<1x128xf32> to vector<16x128xf32>
      %43 = arith.mulf %40, %42 : vector<16x128xf32>
      %c0_29 = arith.constant 0 : index
      %c0_30 = arith.constant 0 : index
      %44 = vector.load %arg8[%c0_29, %c0_30] : memref<1x128xf32, #tpu.memory_space<vmem>>, vector<1x128xf32>
      %45 = vector.broadcast %44 : vector<1x128xf32> to vector<16x128xf32>
      %46 = arith.addf %43, %45 : vector<16x128xf32>
      %c0_31 = arith.constant 0 : index
      %c0_32 = arith.constant 0 : index
      %47 = vector.load %arg9[%c0_31, %c0_32] : memref<16x128xf32, #tpu.memory_space<vmem>>, vector<16x128xf32>
      tpu.vector_store %arg9[%c0_31, %c0_32], %46 {strides = array<i32>} : memref<16x128xf32, #tpu.memory_space<vmem>>, vector<16x128xf32>,
    } else {
    }
    return
  }
  func.func @transform_0(%arg0: i32, %arg1: i32) -> (i32, i32) {
    %c0_i32 = arith.constant 0 : i32
    %c0_i32_0 = arith.constant 0 : i32
    return %arg0, %c0_i32 : i32, i32
  }
  func.func @transform_1(%arg0: i32, %arg1: i32) -> (i32, i32) {
    %c0_i32 = arith.constant 0 : i32
    %c0_i32_0 = arith.constant 0 : i32
    return %c0_i32, %arg1 : i32, i32
  }
  func.func @transform_2(%arg0: i32, %arg1: i32) -> (i32, i32) {
    %c0_i32 = arith.constant 0 : i32
    %c0_i32_0 = arith.constant 0 : i32
    return %c0_i32, %arg1 : i32, i32
  }
  func.func @transform_3(%arg0: i32, %arg1: i32) -> (i32, i32) {
    %c0_i32 = arith.constant 0 : i32
    %c0_i32_0 = arith.constant 0 : i32
    return %arg1, %c0_i32 : i32, i32
  }
  func.func @transform_4(%arg0: i32, %arg1: i32) -> (i32, i32) {
    %c0_i32 = arith.constant 0 : i32
    %c0_i32_0 = arith.constant 0 : i32
    %c0_i32_1 = arith.constant 0 : i32
    return %c0_i32, %c0_i32_0 : i32, i32
  }
  func.func @transform_5(%arg0: i32, %arg1: i32) -> (i32, i32) {
    %c0_i32 = arith.constant 0 : i32
    %c0_i32_0 = arith.constant 0 : i32
    %c0_i32_1 = arith.constant 0 : i32
    return %c0_i32, %c0_i32_0 : i32, i32
  }
  func.func @transform_6(%arg0: i32, %arg1: i32) -> (i32, i32) {
    %c0_i32 = arith.constant 0 : i32
    %c0_i32_0 = arith.constant 0 : i32
    %c0_i32_1 = arith.constant 0 : i32
    return %c0_i32, %c0_i32_0 : i32, i32
  }
  func.func @transform_7(%arg0: i32, %arg1: i32) -> (i32, i32) {
    %c0_i32 = arith.constant 0 : i32
    %c0_i32_0 = arith.constant 0 : i32
    return %arg0, %c0_i32 : i32, i32
  }
}

</mosaic_0001>

<llo_original>
// kernel: tpu_custom_call.1
$region0: #{tpu_custom_call.1}
  #allocation0 [shape = 'u32[]', space=smem, size = 0x4, offset = 0x4, fixed_abs, tag = 'smem constant byte address 0x4 - core index']
  #allocation1 [shape = 'u32[72,128]{1,0:T(1,128)}', space=vmem, size = 0x9000, scoped, tag = 'internal scratch']
  %s0 = inlined_call_operand.hbm [shape: f32[16,128], index: 0, kind: input, shape index: {}]
  %s1 = inlined_call_operand.hbm [shape: f32[128,256], index: 1, kind: input, shape index: {}]
  %s2 = inlined_call_operand.hbm [shape: f32[1,256], index: 2, kind: input, shape index: {}]
  %s3 = inlined_call_operand.hbm [shape: f32[256,128], index: 3, kind: input, shape index: {}]
  %s4 = inlined_call_operand.vmem [shape: f32[1,128], index: 4, kind: input, shape index: {}]
  %s5 = inlined_call_operand.vmem [shape: f32[1,128], index: 5, kind: input, shape index: {}]
  %s6 = inlined_call_operand.vmem [shape: f32[1,128], index: 6, kind: input, shape index: {}]
  %s7 = inlined_call_operand.hbm [shape: f32[16,128], index: 7, kind: output, shape index: {}]
  %s8 = sld [smem:[#allocation0]]
  $region62: #{tpu_custom_call.1} parent=0
    _
  %s10 = ssub.s32 1, %s8
  %s11 = scalar_select 0, %s10, %s8
  $region1: #{tpu_custom_call.1} parent=0
    #allocation2 [shape = 'u8[8192]{0}', space=vmem, size = 0x2000, scoped, tag = 'input window, operand 0, single buffered']
    #allocation3 [shape = 's32[1]{0}', space=sflag, size = 0x4, scoped, tag = 'scoped memory for tpu_custom_call.1']
    #allocation4 [shape = 's32[1]{0}', space=sflag, size = 0x4, scoped, tag = 'scoped memory for tpu_custom_call.1']
    #allocation5 [shape = 'u8[131072]{0}', space=vmem, size = 0x20000, scoped, tag = 'input window, operand 1, single buffered']
    #allocation6 [shape = 's32[1]{0}', space=sflag, size = 0x4, scoped, tag = 'scoped memory for tpu_custom_call.1']
    #allocation7 [shape = 'u8[1024]{0}', space=vmem, size = 0x400, scoped, tag = 'input window, operand 2, single buffered']
    #allocation8 [shape = 'u8[131072]{0}', space=vmem, size = 0x20000, scoped, tag = 'input window, operand 3, single buffered']
    #allocation9 [shape = 's32[1]{0}', space=sflag, size = 0x4, scoped, tag = 'scoped memory for tpu_custom_call.1']
    #allocation10 [shape = 'u8[8192]{0}', space=vmem, size = 0x2000, scoped, tag = 'output window, operand 0, single buffered']
    %12 = vsyncpa [#allocation3], 0
    %13 = vsyncpa [#allocation6], 0
    %14 = vsyncpa [#allocation9], 0
    %15 = vsyncpa [#allocation4], 0
    // Predicated region
    $region2: #{tpu_custom_call.1} parent=1 // pred_check
      _
    $region3: #{tpu_custom_call.1} parent=1 // pred_check_branch
      %17 = sbr.rel (0) target = $region5
    $region4: #{tpu_custom_call.1} parent=1 // pred_region
      %19 = vsyncadd [#allocation3], 0
      %s20 = sshll.u32 %s0, 4
      %s21 = int_to_ptr.hbm [resolvable:$true] %s20
      %s22 = sshll.u32 [#allocation2], 4
      %s23 = int_to_ptr.vmem [resolvable:$true] %s22
      %28 = dma.hbm_to_vmem [thread:$0]  %s21, 256, %s23, [#allocation3], 128, 128, 8
    $region5: #{tpu_custom_call.1} parent=1 // pred_fallthru
      _
    // Predicated region
    $region6: #{tpu_custom_call.1} parent=1 // pred_check
      _
    $region7: #{tpu_custom_call.1} parent=1 // pred_check_branch
      %30 = sbr.rel (0) target = $region9
    $region8: #{tpu_custom_call.1} parent=1 // pred_region
      %32 = vsyncadd [#allocation6], 0
      %s33 = sshll.u32 %s1, 4
      %s34 = int_to_ptr.hbm [resolvable:$true] %s33
      %s35 = sshll.u32 [#allocation5], 4
      %s36 = int_to_ptr.vmem [resolvable:$true] %s35
      %41 = dma.hbm_to_vmem [thread:$0]  %s34, 4096, %s36, [#allocation6], 256, 256, 16
    $region9: #{tpu_custom_call.1} parent=1 // pred_fallthru
      _
    // Predicated region
    $region10: #{tpu_custom_call.1} parent=1 // pred_check
      _
    $region11: #{tpu_custom_call.1} parent=1 // pred_check_branch
      %43 = sbr.rel (0) target = $region13
    $region12: #{tpu_custom_call.1} parent=1 // pred_region
      %45 = vsyncadd [#allocation6], 0
      %s47 = sshll.u32 %s2, 4
      %s48 = int_to_ptr.hbm [resolvable:$true] %s47
      %s49 = sshll.u32 [#allocation7], 4
      %s50 = int_to_ptr.vmem [resolvable:$true] %s49
      %52 = dma.hbm_to_vmem [thread:$0]  %s48, 32, %s50, [#allocation6]
    $region13: #{tpu_custom_call.1} parent=1 // pred_fallthru
      _
    // Predicated region
    $region14: #{tpu_custom_call.1} parent=1 // pred_check
      _
    $region15: #{tpu_custom_call.1} parent=1 // pred_check_branch
      %54 = sbr.rel (0) target = $region17
    $region16: #{tpu_custom_call.1} parent=1 // pred_region
      %56 = vsyncadd [#allocation9], 0
      %s57 = sshll.u32 %s3, 4
      %s58 = int_to_ptr.hbm [resolvable:$true] %s57
      %s59 = sshll.u32 [#allocation8], 4
      %s60 = int_to_ptr.vmem [resolvable:$true] %s59
      %65 = dma.hbm_to_vmem [thread:$0]  %s58, 4096, %s60, [#allocation9], 128, 128, 8
    $region17: #{tpu_custom_call.1} parent=1 // pred_fallthru
      _
    // Predicated region
    $region18: #{tpu_custom_call.1} parent=1 // pred_check
      _
    $region19: #{tpu_custom_call.1} parent=1 // pred_check_branch
      %67 = sbr.rel (0) target = $region21
    $region20: #{tpu_custom_call.1} parent=1 // pred_region
      _
    $region21: #{tpu_custom_call.1} parent=1 // pred_fallthru
      _
    // Predicated region
    $region22: #{tpu_custom_call.1} parent=1 // pred_check
      _
    $region23: #{tpu_custom_call.1} parent=1 // pred_check_branch
      %69 = sbr.rel (0) target = $region25
    $region24: #{tpu_custom_call.1} parent=1 // pred_region
      _
    $region25: #{tpu_custom_call.1} parent=1 // pred_fallthru
      _
    // Predicated region
    $region26: #{tpu_custom_call.1} parent=1 // pred_check
      _
    $region27: #{tpu_custom_call.1} parent=1 // pred_check_branch
      %71 = sbr.rel (0) target = $region29
    $region28: #{tpu_custom_call.1} parent=1 // pred_region
      _
    $region29: #{tpu_custom_call.1} parent=1 // pred_fallthru
      _
    // Predicated region
    $region30: #{tpu_custom_call.1} parent=1 // pred_check
      _
    $region31: #{tpu_custom_call.1} parent=1 // pred_check_branch
      %73 = sbr.rel (0) target = $region33
    $region32: #{tpu_custom_call.1} parent=1 // pred_region
      %75 = dma.done [#allocation3], 256
    $region33: #{tpu_custom_call.1} parent=1 // pred_fallthru
      _
    // Predicated region
    $region34: #{tpu_custom_call.1} parent=1 // pred_check
      _
    $region35: #{tpu_custom_call.1} parent=1 // pred_check_branch
      %77 = sbr.rel (0) target = $region37
    $region36: #{tpu_custom_call.1} parent=1 // pred_region
      %79 = dma.done [#allocation6], 4096
    $region37: #{tpu_custom_call.1} parent=1 // pred_fallthru
      _
    // Predicated region
    $region38: #{tpu_custom_call.1} parent=1 // pred_check
      _
    $region39: #{tpu_custom_call.1} parent=1 // pred_check_branch
      %81 = sbr.rel (0) target = $region41
    $region40: #{tpu_custom_call.1} parent=1 // pred_region
      %83 = dma.done [#allocation6], 32
    $region41: #{tpu_custom_call.1} parent=1 // pred_fallthru
      _
    // Predicated region
    $region42: #{tpu_custom_call.1} parent=1 // pred_check
      _
    $region43: #{tpu_custom_call.1} parent=1 // pred_check_branch
      %85 = sbr.rel (0) target = $region45
    $region44: #{tpu_custom_call.1} parent=1 // pred_region
      %87 = dma.done [#allocation9], 4096
    $region45: #{tpu_custom_call.1} parent=1 // pred_fallthru
      _
    %p88 = scmp.eq.s32.totalorder 0, 0
    // Predicated region
    $region46: #{tpu_custom_call.1} parent=1 // pred_check
      %p89 = pneg %p88
    $region47: #{tpu_custom_call.1} parent=1 // pred_check_branch
      %91 = sbr.rel (%p89) target = $region49
    $region48: #{tpu_custom_call.1} parent=1 // pred_region
      %92 = vst [vmem:[#allocation10] sm:$0xff] 0.0
      %93 = vst [vmem:[#allocation10 + $0x8] sm:$0xff] 0.0
    $region49: #{tpu_custom_call.1} parent=1 // pred_fallthru
      _
    %v94 = vld [vmem:[#allocation2] sm:$0xff]
    %v95 = vld [vmem:[#allocation2 + $0x8] sm:$0xff]
    %v96 = vld [vmem:[#allocation5] sm:$0xff]
    %v97 = vld [vmem:[#allocation5 + $0x8] sm:$0xff]
    %v98 = vld [vmem:[#allocation5 + $0x10] sm:$0xff]
    %v99 = vld [vmem:[#allocation5 + $0x18] sm:$0xff]
    %v100 = vld [vmem:[#allocation5 + $0x20] sm:$0xff]
    %v101 = vld [vmem:[#allocation5 + $0x28] sm:$0xff]
    %v102 = vld [vmem:[#allocation5 + $0x30] sm:$0xff]
    %v103 = vld [vmem:[#allocation5 + $0x38] sm:$0xff]
    %v104 = vld [vmem:[#allocation5 + $0x40] sm:$0xff]
    %v105 = vld [vmem:[#allocation5 + $0x48] sm:$0xff]
    %v106 = vld [vmem:[#allocation5 + $0x50] sm:$0xff]
    %v107 = vld [vmem:[#allocation5 + $0x58] sm:$0xff]
    %v108 = vld [vmem:[#allocation5 + $0x60] sm:$0xff]
    %v109 = vld [vmem:[#allocation5 + $0x68] sm:$0xff]
    %v110 = vld [vmem:[#allocation5 + $0x70] sm:$0xff]
    %v111 = vld [vmem:[#allocation5 + $0x78] sm:$0xff]
    %v112 = vld [vmem:[#allocation5 + $0x80] sm:$0xff]
    %v113 = vld [vmem:[#allocation5 + $0x88] sm:$0xff]
    %v114 = vld [vmem:[#allocation5 + $0x90] sm:$0xff]
    %v115 = vld [vmem:[#allocation5 + $0x98] sm:$0xff]
    %v116 = vld [vmem:[#allocation5 + $0xa0] sm:$0xff]
    %v117 = vld [vmem:[#allocation5 + $0xa8] sm:$0xff]
    %v118 = vld [vmem:[#allocation5 + $0xb0] sm:$0xff]
    %v119 = vld [vmem:[#allocation5 + $0xb8] sm:$0xff]
    %v120 = vld [vmem:[#allocation5 + $0xc0] sm:$0xff]
    %v121 = vld [vmem:[#allocation5 + $0xc8] sm:$0xff]
    %v122 = vld [vmem:[#allocation5 + $0xd0] sm:$0xff]
    %v123 = vld [vmem:[#allocation5 + $0xd8] sm:$0xff]
    %v124 = vld [vmem:[#allocation5 + $0xe0] sm:$0xff]
    %v125 = vld [vmem:[#allocation5 + $0xe8] sm:$0xff]
    %v126 = vld [vmem:[#allocation5 + $0xf0] sm:$0xff]
    %v127 = vld [vmem:[#allocation5 + $0xf8] sm:$0xff]
    %v128 = vld [vmem:[#allocation7] sm:$0x3]
    %v130 = vperm.slane %v128, 0
    %v131 = vperm.slane %v128, 1
    %134 = vmatpush.msra.mxu0 %v126
    %135 = vmatpush.msra.mxu0 %v124
    %136 = vmatpush.msra.mxu0 %v122
    %137 = vmatpush.msra.mxu0 %v120
    %138 = vmatpush.msra.mxu0 %v118
    %139 = vmatpush.msra.mxu0 %v116
    %140 = vmatpush.msra.mxu0 %v114
    %141 = vmatpush.msra.mxu0 %v112
    %142 = vmatpush.msra.mxu0 %v110
    %143 = vmatpush.msra.mxu0 %v108
    %144 = vmatpush.msra.mxu0 %v106
    %145 = vmatpush.msra.mxu0 %v104
    %146 = vmatpush.msra.mxu0 %v102
    %147 = vmatpush.msra.mxu0 %v100
    %148 = vmatpush.msra.mxu0 %v98
    %149 = vmatpush.msra.mxu0 %v96
    %150 = vmatmul.f32.gmra.mxu0 %v94
    %v151 = vpop.f32.mrf.mxu0
    %v152 = vadd.f32 %v130, %v151
    %153 = vmatmul.f32.gmra.mxu0 %v95
    %v154 = vpop.f32.mrf.mxu0
    %v155 = vadd.f32 %v130, %v154
    %156 = vdwg.mxu0
    %157 = vmatpush.msra.mxu0 %v127
    %158 = vmatpush.msra.mxu0 %v125
    %159 = vmatpush.msra.mxu0 %v123
    %160 = vmatpush.msra.mxu0 %v121
    %161 = vmatpush.msra.mxu0 %v119
    %162 = vmatpush.msra.mxu0 %v117
    %163 = vmatpush.msra.mxu0 %v115
    %164 = vmatpush.msra.mxu0 %v113
    %165 = vmatpush.msra.mxu0 %v111
    %166 = vmatpush.msra.mxu0 %v109
    %167 = vmatpush.msra.mxu0 %v107
    %168 = vmatpush.msra.mxu0 %v105
    %169 = vmatpush.msra.mxu0 %v103
    %170 = vmatpush.msra.mxu0 %v101
    %171 = vmatpush.msra.mxu0 %v99
    %172 = vmatpush.msra.mxu0 %v97
    %173 = vmatmul.f32.gmra.mxu0 %v94
    %v174 = vpop.f32.mrf.mxu0
    %v175 = vadd.f32 %v131, %v174
    %176 = vmatmul.f32.gmra.mxu0 %v95
    %v177 = vpop.f32.mrf.mxu0
    %v178 = vadd.f32 %v131, %v177
    %179 = vdwg.mxu0
    %v180 = vmax.f32 %v152, 0.0
    %v181 = vmax.f32 %v175, 0.0
    %v182 = vmax.f32 %v155, 0.0
    %v183 = vmax.f32 %v178, 0.0
    %v184 = vld [vmem:[#allocation10] sm:$0xff]
    %v185 = vld [vmem:[#allocation10 + $0x8] sm:$0xff]
    %v186 = vld [vmem:[#allocation8] sm:$0xff]
    %v187 = vld [vmem:[#allocation8 + $0x8] sm:$0xff]
    %v188 = vld [vmem:[#allocation8 + $0x10] sm:$0xff]
    %v189 = vld [vmem:[#allocation8 + $0x18] sm:$0xff]
    %v190 = vld [vmem:[#allocation8 + $0x20] sm:$0xff]
    %v191 = vld [vmem:[#allocation8 + $0x28] sm:$0xff]
    %v192 = vld [vmem:[#allocation8 + $0x30] sm:$0xff]
    %v193 = vld [vmem:[#allocation8 + $0x38] sm:$0xff]
    %v194 = vld [vmem:[#allocation8 + $0x40] sm:$0xff]
    %v195 = vld [vmem:[#allocation8 + $0x48] sm:$0xff]
    %v196 = vld [vmem:[#allocation8 + $0x50] sm:$0xff]
    %v197 = vld [vmem:[#allocation8 + $0x58] sm:$0xff]
    %v198 = vld [vmem:[#allocation8 + $0x60] sm:$0xff]
    %v199 = vld [vmem:[#allocation8 + $0x68] sm:$0xff]
    %v200 = vld [vmem:[#allocation8 + $0x70] sm:$0xff]
    %v201 = vld [vmem:[#allocation8 + $0x78] sm:$0xff]
    %v202 = vld [vmem:[#allocation8 + $0x80] sm:$0xff]
    %v203 = vld [vmem:[#allocation8 + $0x88] sm:$0xff]
    %v204 = vld [vmem:[#allocation8 + $0x90] sm:$0xff]
    %v205 = vld [vmem:[#allocation8 + $0x98] sm:$0xff]
    %v206 = vld [vmem:[#allocation8 + $0xa0] sm:$0xff]
    %v207 = vld [vmem:[#allocation8 + $0xa8] sm:$0xff]
    %v208 = vld [vmem:[#allocation8 + $0xb0] sm:$0xff]
    %v209 = vld [vmem:[#allocation8 + $0xb8] sm:$0xff]
    %v210 = vld [vmem:[#allocation8 + $0xc0] sm:$0xff]
    %v211 = vld [vmem:[#allocation8 + $0xc8] sm:$0xff]
    %v212 = vld [vmem:[#allocation8 + $0xd0] sm:$0xff]
    %v213 = vld [vmem:[#allocation8 + $0xd8] sm:$0xff]
    %v214 = vld [vmem:[#allocation8 + $0xe0] sm:$0xff]
    %v215 = vld [vmem:[#allocation8 + $0xe8] sm:$0xff]
    %v216 = vld [vmem:[#allocation8 + $0xf0] sm:$0xff]
    %v217 = vld [vmem:[#allocation8 + $0xf8] sm:$0xff]
    %218 = vmatpush.msra.mxu0 %v201
    %219 = vmatpush.msra.mxu0 %v200
    %220 = vmatpush.msra.mxu0 %v199
    %221 = vmatpush.msra.mxu0 %v198
    %222 = vmatpush.msra.mxu0 %v197
    %223 = vmatpush.msra.mxu0 %v196
    %224 = vmatpush.msra.mxu0 %v195
    %225 = vmatpush.msra.mxu0 %v194
    %226 = vmatpush.msra.mxu0 %v193
    %227 = vmatpush.msra.mxu0 %v192
    %228 = vmatpush.msra.mxu0 %v191
    %229 = vmatpush.msra.mxu0 %v190
    %230 = vmatpush.msra.mxu0 %v189
    %231 = vmatpush.msra.mxu0 %v188
    %232 = vmatpush.msra.mxu0 %v187
    %233 = vmatpush.msra.mxu0 %v186
    %234 = vmatmul.f32.gmra.mxu0 %v180
    %v235 = vpop.f32.mrf.mxu0
    %v236 = vadd.f32 0.0, %v235
    %237 = vmatmul.f32.gmra.mxu0 %v182
    %v238 = vpop.f32.mrf.mxu0
    %v239 = vadd.f32 0.0, %v238
    %240 = vdwg.mxu0
    %241 = vmatpush.msra.mxu0 %v217
    %242 = vmatpush.msra.mxu0 %v216
    %243 = vmatpush.msra.mxu0 %v215
    %244 = vmatpush.msra.mxu0 %v214
    %245 = vmatpush.msra.mxu0 %v213
    %246 = vmatpush.msra.mxu0 %v212
    %247 = vmatpush.msra.mxu0 %v211
    %248 = vmatpush.msra.mxu0 %v210
    %249 = vmatpush.msra.mxu0 %v209
    %250 = vmatpush.msra.mxu0 %v208
    %251 = vmatpush.msra.mxu0 %v207
    %252 = vmatpush.msra.mxu0 %v206
    %253 = vmatpush.msra.mxu0 %v205
    %254 = vmatpush.msra.mxu0 %v204
    %255 = vmatpush.msra.mxu0 %v203
    %256 = vmatpush.msra.mxu0 %v202
    %257 = vmatmul.f32.gmra.mxu0 %v181
    %v258 = vpop.f32.mrf.mxu0
    %v259 = vadd.f32 %v236, %v258
    %260 = vmatmul.f32.gmra.mxu0 %v183
    %v261 = vpop.f32.mrf.mxu0
    %v262 = vadd.f32 %v239, %v261
    %263 = vdwg.mxu0
    %v264 = vadd.f32 %v184, %v259
    %v265 = vadd.f32 %v185, %v262
    %266 = vst [vmem:[#allocation10] sm:$0xff] %v264
    %267 = vst [vmem:[#allocation10 + $0x8] sm:$0xff] %v265
    // Predicated region
    $region50: #{tpu_custom_call.1} parent=1 // pred_check
      %p268 = pneg %p88
    $region51: #{tpu_custom_call.1} parent=1 // pred_check_branch
      %270 = sbr.rel (%p268) target = $region53
    $region52: #{tpu_custom_call.1} parent=1 // pred_region
      %v271 = vld [vmem:[#allocation2] sm:$0xff]
      %v272 = vld [vmem:[#allocation2 + $0x8] sm:$0xff]
      %v273 = vld [vmem:[#allocation10] sm:$0xff]
      %v274 = vld [vmem:[#allocation10 + $0x8] sm:$0xff]
      %v275 = vadd.f32 %v271, %v273
      %v276 = vadd.f32 %v272, %v274
      %v277 = vld [vmem:[%s4] sm:$0x1]
      %v279 = vperm.slane %v277, 0
      %v281 = vadd.f32 %v275, %v279
      %v282 = vadd.f32 %v276, %v279
      %283 = vadd.xlane.f32.xlu0 %v281
      %v284 = vpop.xlane.xlu0 %283
      %285 = vadd.xlane.f32.xlu0 %v282
      %v286 = vpop.xlane.xlu0 %285
      %v287 = vrcp.pop 128.0
      %v288 = vmul.f32 128.0, %v287
      %v289 = vsub.f32 1.0, %v288
      %v290 = vmul.f32 %v287, %v289
      %v291 = vadd.f32 %v287, %v290
      %vm292 = vweird.f32 %v287
      %v293 = vsel %vm292, %v287, %v291
      %v294 = vmul.f32 %v284, %v293
      %v295 = vmul.f32 %v286, %v293
      %v296 = vsub.f32 %v281, %v294
      %v297 = vsub.f32 %v282, %v295
      %v298 = vmul.f32 %v296, %v296
      %v299 = vmul.f32 %v297, %v297
      %300 = vadd.xlane.f32.xlu0 %v298
      %v301 = vpop.xlane.xlu0 %300
      %302 = vadd.xlane.f32.xlu0 %v299
      %v303 = vpop.xlane.xlu0 %302
      %v304 = vmul.f32 %v301, %v293
      %v305 = vmul.f32 %v303, %v293
      %v306 = vadd.f32 %v304, 1e-05
      %v307 = vadd.f32 %v305, 1e-05
      %v308 = vrsqrt.pop %v306
      %v309 = vmul.f32 %v308, %v306
      %v310 = vmul.f32 %v309, %v308
      %v311 = vmul.f32 0.5, %v310
      %v312 = vsub.f32 1.5, %v311
      %v313 = vmul.f32 %v308, %v312
      %vm314 = vweird.f32 %v306
      %vm315 = vweird.f32 %v308
      %vm316 = vmor %vm314, %vm315
      %v317 = vsel %vm316, %v308, %v313
      %v318 = vrsqrt.pop %v307
      %v319 = vmul.f32 %v318, %v307
      %v320 = vmul.f32 %v319, %v318
      %v321 = vmul.f32 0.5, %v320
      %v322 = vsub.f32 1.5, %v321
      %v323 = vmul.f32 %v318, %v322
      %vm324 = vweird.f32 %v307
      %vm325 = vweird.f32 %v318
      %vm326 = vmor %vm324, %vm325
      %v327 = vsel %vm326, %v318, %v323
      %v328 = vmul.f32 %v296, %v317
      %v329 = vmul.f32 %v297, %v327
      %v330 = vld [vmem:[%s5] sm:$0x1]
      %v332 = vperm.slane %v330, 0
      %v334 = vmul.f32 %v328, %v332
      %v335 = vmul.f32 %v329, %v332
      %v336 = vld [vmem:[%s6] sm:$0x1]
      %v338 = vperm.slane %v336, 0
      %v340 = vadd.f32 %v334, %v338
      %v341 = vadd.f32 %v335, %v338
      %342 = vst [vmem:[#allocation10] sm:$0xff] %v340
      %343 = vst [vmem:[#allocation10 + $0x8] sm:$0xff] %v341
    $region53: #{tpu_custom_call.1} parent=1 // pred_fallthru
      _
    // Predicated region
    $region54: #{tpu_custom_call.1} parent=1 // pred_check
      _
    $region55: #{tpu_custom_call.1} parent=1 // pred_check_branch
      %345 = sbr.rel (0) target = $region57
    $region56: #{tpu_custom_call.1} parent=1 // pred_region
      %347 = vsyncadd [#allocation4], 0
      %s348 = sshll.u32 [#allocation10], 4
      %s349 = int_to_ptr.vmem [resolvable:$true] %s348
      %s350 = sshll.u32 %s7, 4
      %s351 = int_to_ptr.hbm [resolvable:$true] %s350
      %356 = dma.vmem_to_hbm [thread:$0]  %s349, 256, %s351, [#allocation4], 128, 128, 8
    $region57: #{tpu_custom_call.1} parent=1 // pred_fallthru
      _
    // Predicated region
    $region58: #{tpu_custom_call.1} parent=1 // pred_check
      _
    $region59: #{tpu_custom_call.1} parent=1 // pred_check_branch
      %358 = sbr.rel (0) target = $region61
    $region60: #{tpu_custom_call.1} parent=1 // pred_region
      %360 = dma.done [#allocation4], 256
    $region61: #{tpu_custom_call.1} parent=1 // pred_fallthru
      _
    %361 = vsyncpa [#allocation3], 1
    %362 = vsyncpa [#allocation6], 1
    %363 = vsyncpa [#allocation9], 1
    %364 = vsyncpa [#allocation4], 1

</llo_original>
